<compile_context>
chip_gen: v7x
topology: tpu7x:2x2x1
jax: 0.10.0
libtpu: 0.0.40
codegen_flags: <defaults>
</compile_context>

<pallas_src>
import functools

import jax
import jax.numpy as jnp
from jax import lax
from jax.experimental import pallas as pl
from jax.experimental.pallas import tpu as pltpu

_LANE = 128
# ~2M elements per input block: 8 MiB f32 / 4 MiB bf16.  Peak VMEM per step is
# roughly 2x input block (double buffer) + ~2x f32-block of intermediates
# (upcast/transpose + exp), i.e. ~32 MiB for f32 -> fits v7x (64 MiB) with
# headroom under the explicit 48 MiB limit, and trivially fits v5e/v6e.
_TARGET_BLOCK_ELEMS = 2 * 1024 * 1024
_VMEM_LIMIT_BYTES = 48 * 1024 * 1024
# Force >= 2 grid tiles (v7x megacore) once the problem exceeds this size.
_MIN_MULTI_TILE_BYTES = 2 * 1024 * 1024


def _round_up(x, m):
    return ((x + m - 1) // m) * m


def _adv_loss_tile_kernel(x_ref, o_ref, *, lane_dense, tile_batch, batch_size):
    """One batch tile: partial sum over samples of sum_c |1/C - softmax(x)_c|.

    x_ref block is always (TB, C).  When lane_dense (C < 128) the f32 tile is
    transposed in VMEM (XLU, hidden under the DMA) so the batch sits on the
    128-wide lane axis and the class reductions run over sublanes.
    o_ref is a (1, 1, 128) lane-dense block holding this tile's partial sum.
    """
    pid = pl.program_id(0)
    x = x_ref[...].astype(jnp.float32)            # (TB, C)
    C = x.shape[1]
    inv_c = jnp.float32(1.0 / C)

    if lane_dense:
        xt = x.T                                  # (C, TB): batch on lanes
        class_axis, batch_axis = 0, 1
    else:
        xt = x                                    # (TB, C): classes on lanes
        class_axis, batch_axis = 1, 0

    # Numerically stable softmax pieces along the class axis; p never built.
    m = jnp.max(xt, axis=class_axis, keepdims=True)
    e = jnp.exp(xt - m)
    denom = jnp.sum(e, axis=class_axis, keepdims=True)
    dist = jnp.sum(jnp.abs(e - denom * inv_c), axis=class_axis, keepdims=True)
    per_sample = dist / denom                     # exact divide (review)

    # Mask batch positions past the true batch size (tail tile / OOB padding).
    idx = pid * tile_batch + lax.broadcasted_iota(
        jnp.int32, per_sample.shape, batch_axis)
    per_sample = jnp.where(idx < batch_size, per_sample, 0.0)

    partial = jnp.sum(per_sample)
    # Lane-dense per-tile partial; wrapper reads [:, 0, 0].
    o_ref[...] = jnp.broadcast_to(partial, (1, 1, _LANE))


def adv_loss(inputs, *, tile_batch=None):
    """inputs: (B, C) array of logits. Returns scalar f32 loss (mean over batch)."""
    assert inputs.ndim == 2, "AdvLoss expects a 2-D (B, C) input"
    B, C = inputs.shape
    itemsize = jnp.dtype(inputs.dtype).itemsize
    # Sublane granule: 8 rows for 4-byte dtypes, 16 for bf16/f16, 32 for int8.
    unit = max(8, 32 // max(1, itemsize))
    lane_dense = C < _LANE  # small class count: relayout in-kernel

    if tile_batch is None:
        cap = max(unit, (_TARGET_BLOCK_ELEMS // C) // unit * unit)
        if lane_dense and cap >= _LANE:
            cap = (cap // _LANE) * _LANE          # keep lane axis dense
        tb = min(_round_up(B, unit), cap)
        # Guarantee >= 2 grid steps for non-trivial problems (v7x megacore).
        if tb >= B and B * C * itemsize > _MIN_MULTI_TILE_BYTES:
            tb = max(unit, _round_up(pl.cdiv(B, 2), unit))
        tile_batch = tb
    else:
        tile_batch = max(unit, _round_up(tile_batch, unit))

    num_tiles = pl.cdiv(B, tile_batch)

    kernel = functools.partial(
        _adv_loss_tile_kernel,
        lane_dense=lane_dense,
        tile_batch=tile_batch,
        batch_size=B,
    )

    partials = pl.pallas_call(
        kernel,
        grid=(num_tiles,),
        in_specs=[pl.BlockSpec((tile_batch, C), lambda i: (i, 0))],
        out_specs=pl.BlockSpec((1, 1, _LANE), lambda i: (i, 0, 0)),
        out_shape=jax.ShapeDtypeStruct((num_tiles, 1, _LANE), jnp.float32),
        compiler_params=pltpu.CompilerParams(
            dimension_semantics=("parallel",),
            vmem_limit_bytes=_VMEM_LIMIT_BYTES,
        ),
    )(inputs)

    # Tiny final reduce over per-tile partials; divide by the true batch size.
    return jnp.sum(partials[:, 0, 0]) / jnp.float32(B)


def _adv_loss_ref(inputs):
    # Pure-JAX reference for sanity checking.
    p = jax.nn.softmax(inputs.astype(jnp.float32), axis=1)
    C = inputs.shape[1]
    return jnp.mean(jnp.sum(jnp.abs(1.0 / C - p), axis=1))


if __name__ == "__main__":
    key = jax.random.PRNGKey(0)
    k1, k2, k3, k4 = jax.random.split(key, 4)

    # 1) Small-C path (in-kernel transpose, batch on lanes), single tile.
    x1 = jax.random.normal(k1, (128, 16), dtype=jnp.float32)
    out1 = jax.block_until_ready(adv_loss(x1))
    ref1 = jax.block_until_ready(_adv_loss_ref(x1))
    assert jnp.allclose(out1, ref1, atol=1e-3, rtol=1e-3), (out1, ref1)

    # 2) Large-C path (classes on lanes, no transpose), single tile.
    x2 = jax.random.normal(k2, (16, 256), dtype=jnp.float32)
    out2 = jax.block_until_ready(adv_loss(x2))
    ref2 = jax.block_until_ready(_adv_loss_ref(x2))
    assert jnp.allclose(out2, ref2, atol=1e-3, rtol=1e-3), (out2, ref2)

    # 3) Multi-tile grid with a masked tail (B % TB != 0).
    x3 = jax.random.normal(k3, (300, 32), dtype=jnp.float32)
    out3 = jax.block_until_ready(adv_loss(x3, tile_batch=128))
    ref3 = jax.block_until_ready(_adv_loss_ref(x3))
    assert jnp.allclose(out3, ref3, atol=1e-3, rtol=1e-3), (out3, ref3)

    # 4) bf16 logits streamed directly (no wrapper upcast), small-C path.
    x4 = jax.random.normal(k4, (128, 48), dtype=jnp.bfloat16)
    out4 = jax.block_until_ready(adv_loss(x4))
    ref4 = jax.block_until_ready(_adv_loss_ref(x4))
    assert jnp.allclose(out4, ref4, atol=1e-3, rtol=1e-3), (out4, ref4)

    print("KERNEL_OK")
</pallas_src>

<mosaic_0001>
module attributes {stable_mosaic.version = 11 : i64} {
  func.func @_adv_loss_tile_kernel(%arg0: i32, %arg1: memref<128x16xf32, #tpu.memory_space<vmem>>, %arg2: memref<1x1x128xf32, #tpu.memory_space<vmem>>) attributes {dimension_semantics = [#tpu.dimension_semantics<parallel>], iteration_bounds = array<i64: 1>, scalar_prefetch = 0 : i64, scratch_operands = 0 : i64, tpu.core_type = #tpu.core_type<tc>, window_params = [{transform_indices = @transform_0, window_bounds = array<i64: 128, 16>}, {transform_indices = @transform_1, window_bounds = array<i64: 1, 1, 128>}]} {
    %c0 = arith.constant 0 : index
    %c0_0 = arith.constant 0 : index
    %0 = vector.load %arg1[%c0, %c0_0] : memref<128x16xf32, #tpu.memory_space<vmem>>, vector<128x16xf32>
    %1 = tpu.transpose %0, [1, 0] : vector<128x16xf32> -> vector<16x128xf32>
    %cst = arith.constant dense<0xFF800000> : vector<128xf32>
    %2 = vector.multi_reduction <maximumf>, %1, %cst [0] : vector<16x128xf32> to vector<128xf32>
    %3 = vector.shape_cast %2 : vector<128xf32> to vector<1x128xf32>
    %4 = vector.broadcast %3 : vector<1x128xf32> to vector<16x128xf32>
    %5 = arith.subf %1, %4 : vector<16x128xf32>
    %6 = math.exp %5 : vector<16x128xf32>
    %cst_1 = arith.constant dense<0.000000e+00> : vector<128xf32>
    %7 = vector.multi_reduction <add>, %6, %cst_1 [0] : vector<16x128xf32> to vector<128xf32>
    %8 = vector.shape_cast %7 : vector<128xf32> to vector<1x128xf32>
    %cst_2 = arith.constant 6.250000e-02 : f32
    %9 = vector.broadcast %cst_2 : f32 to vector<1x128xf32>
    %10 = arith.mulf %8, %9 : vector<1x128xf32>
    %11 = vector.broadcast %10 : vector<1x128xf32> to vector<16x128xf32>
    %12 = arith.subf %6, %11 : vector<16x128xf32>
    %13 = math.absf %12 : vector<16x128xf32>
    %cst_3 = arith.constant dense<0.000000e+00> : vector<128xf32>
    %14 = vector.multi_reduction <add>, %13, %cst_3 [0] : vector<16x128xf32> to vector<128xf32>
    %15 = vector.shape_cast %14 : vector<128xf32> to vector<1x128xf32>
    %16 = arith.divf %15, %8 : vector<1x128xf32>
    %c128_i32 = arith.constant 128 : i32
    %17 = arith.muli %arg0, %c128_i32 : i32
    %18 = tpu.iota {dimensions = array<i32: 1>} : vector<1x128xi32>
    %19 = vector.broadcast %17 : i32 to vector<1x128xi32>
    %20 = arith.addi %19, %18 : vector<1x128xi32>
    %c128_i32_4 = arith.constant 128 : i32
    %21 = vector.broadcast %c128_i32_4 : i32 to vector<1x128xi32>
    %22 = arith.cmpi slt, %20, %21 : vector<1x128xi32>
    %cst_5 = arith.constant 0.000000e+00 : f32
    %23 = vector.broadcast %cst_5 : f32 to vector<1x128xf32>
    %24 = arith.select %22, %16, %23 : vector<1x128xi1>, vector<1x128xf32>
    %25 = vector.shape_cast %24 : vector<1x128xf32> to vector<1x1x128xf32>
    %cst_6 = arith.constant dense<0.000000e+00> : vector<1xf32>
    %26 = vector.multi_reduction <add>, %25, %cst_6 [1, 2] : vector<1x1x128xf32> to vector<1xf32>
    %27 = vector.shape_cast %26 : vector<1xf32> to vector<1x1x1xf32>
    %28 = vector.extract %27[0, 0, 0] : f32 from vector<1x1x1xf32>
    %29 = vector.broadcast %28 : f32 to vector<1x1x128xf32>
    %c0_7 = arith.constant 0 : index
    %c0_8 = arith.constant 0 : index
    %c0_9 = arith.constant 0 : index
    %30 = vector.load %arg2[%c0_7, %c0_8, %c0_9] : memref<1x1x128xf32, #tpu.memory_space<vmem>>, vector<1x1x128xf32>
    tpu.vector_store %arg2[%c0_7, %c0_8, %c0_9], %29 {strides = array<i32>} : memref<1x1x128xf32, #tpu.memory_space<vmem>>, vector<1x1x128xf32>,
    return
  }
  func.func @transform_0(%arg0: i32) -> (i32, i32) {
    %c0_i32 = arith.constant 0 : i32
    %c0_i32_0 = arith.constant 0 : i32
    return %arg0, %c0_i32 : i32, i32
  }
  func.func @transform_1(%arg0: i32) -> (i32, i32, i32) {
    %c0_i32 = arith.constant 0 : i32
    %c0_i32_0 = arith.constant 0 : i32
    %c0_i32_1 = arith.constant 0 : i32
    return %arg0, %c0_i32, %c0_i32_0 : i32, i32, i32
  }
}

</mosaic_0001>

<llo_original>
// kernel: tpu_custom_call.1
$region0: #{tpu_custom_call.1}
  #allocation0 [shape = 'u32[]', space=smem, size = 0x4, offset = 0x4, fixed_abs, tag = 'smem constant byte address 0x4 - core index']
  #allocation1 [shape = 'u32[144,128]{1,0:T(1,128)}', space=vmem, size = 0x12000, scoped, tag = 'internal scratch']
  %s0 = inlined_call_operand.vmem [shape: f32[128,16], index: 0, kind: input, shape index: {}]
  %s1 = inlined_call_operand.hbm [shape: f32[1,1,128], index: 1, kind: output, shape index: {}]
  %s2 = sld [smem:[#allocation0]]
  $region14: #{tpu_custom_call.1} parent=0
    _
  %s4 = ssub.s32 1, %s2
  %s5 = scalar_select 0, %s4, %s2
  $region1: #{tpu_custom_call.1} parent=0
    #allocation2 [shape = 'u8[512]{0}', space=vmem, size = 0x400, scoped, tag = 'output window, operand 0, single buffered']
    #allocation3 [shape = 's32[1]{0}', space=sflag, size = 0x4, scoped, tag = 'scoped memory for tpu_custom_call.1']
    %6 = vsyncpa [#allocation3], 0
    // Predicated region
    $region2: #{tpu_custom_call.1} parent=1 // pred_check
      _
    $region3: #{tpu_custom_call.1} parent=1 // pred_check_branch
      %8 = sbr.rel (0) target = $region5
    $region4: #{tpu_custom_call.1} parent=1 // pred_region
      _
    $region5: #{tpu_custom_call.1} parent=1 // pred_fallthru
      _
    %v9 = vld [vmem:[%s0] sm:$0xff]
    %v10 = vld [vmem:[%s0 + $0x8] sm:$0xff]
    %v11 = vld [vmem:[%s0 + $0x10] sm:$0xff]
    %v12 = vld [vmem:[%s0 + $0x18] sm:$0xff]
    %v13 = vld [vmem:[%s0 + $0x20] sm:$0xff]
    %v14 = vld [vmem:[%s0 + $0x28] sm:$0xff]
    %v15 = vld [vmem:[%s0 + $0x30] sm:$0xff]
    %v16 = vld [vmem:[%s0 + $0x38] sm:$0xff]
    %v17 = vld [vmem:[%s0 + $0x40] sm:$0xff]
    %v18 = vld [vmem:[%s0 + $0x48] sm:$0xff]
    %v19 = vld [vmem:[%s0 + $0x50] sm:$0xff]
    %v20 = vld [vmem:[%s0 + $0x58] sm:$0xff]
    %v21 = vld [vmem:[%s0 + $0x60] sm:$0xff]
    %v22 = vld [vmem:[%s0 + $0x68] sm:$0xff]
    %v23 = vld [vmem:[%s0 + $0x70] sm:$0xff]
    %v24 = vld [vmem:[%s0 + $0x78] sm:$0xff]
    %25 = vxpose.xlu0.b32.start [1/16] %v9, 128
    %26 = vxpose.xlu0.b32.cont [2/16] %v10, 128
    %27 = vxpose.xlu0.b32.cont [3/16] %v11, 128
    %28 = vxpose.xlu0.b32.cont [4/16] %v12, 128
    %29 = vxpose.xlu0.b32.cont [5/16] %v13, 128
    %30 = vxpose.xlu0.b32.cont [6/16] %v14, 128
    %31 = vxpose.xlu0.b32.cont [7/16] %v15, 128
    %32 = vxpose.xlu0.b32.cont [8/16] %v16, 128
    %33 = vxpose.xlu0.b32.cont [9/16] %v17, 128
    %34 = vxpose.xlu0.b32.cont [10/16] %v18, 128
    %35 = vxpose.xlu0.b32.cont [11/16] %v19, 128
    %36 = vxpose.xlu0.b32.cont [12/16] %v20, 128
    %37 = vxpose.xlu0.b32.cont [13/16] %v21, 128
    %38 = vxpose.xlu0.b32.cont [14/16] %v22, 128
    %39 = vxpose.xlu0.b32.cont [15/16] %v23, 128
    %40 = vxpose.xlu0.b32.end [16/16] %v24, 128
    %v41 = vpop.trf.xlu0
    %v42 = vpop.trf.xlu0
    %v43 = vpop.trf.xlu0
    %v44 = vpop.trf.xlu0
    %v45 = vpop.trf.xlu0
    %v46 = vpop.trf.xlu0
    %v47 = vpop.trf.xlu0
    %v48 = vpop.trf.xlu0
    %v49 = vpop.trf.xlu0
    %v50 = vpop.trf.xlu0
    %v51 = vpop.trf.xlu0
    %v52 = vpop.trf.xlu0
    %v53 = vpop.trf.xlu0
    %v54 = vpop.trf.xlu0
    %v55 = vpop.trf.xlu0
    %v56 = vpop.trf.xlu0
    %v57 = vmax.f32 %v41, %v42
    %v58 = vrot.slane %v57, 4
    %v59 = vmax.f32 %v57, %v58
    %v60 = vrot.slane %v59, 2
    %v61 = vmax.f32 %v59, %v60
    %v62 = vrot.slane %v61, 1
    %v63 = vmax.f32 %v61, %v62
    %v64 = vsub.f32 %v41, %v63
    %v65 = vsub.f32 %v42, %v63
    %v66 = vmul.f32 %v64, 1.442695
    %v67 = vpow.pop %v66
    %v68 = vmul.f32 %v65, 1.442695
    %v69 = vpow.pop %v68
    %v70 = vadd.f32 %v67, %v69
    %v71 = vrot.slane %v70, 4
    %v72 = vadd.f32 %v70, %v71
    %v73 = vrot.slane %v72, 2
    %v74 = vadd.f32 %v72, %v73
    %v75 = vrot.slane %v74, 1
    %v76 = vadd.f32 %v74, %v75
    %v77 = vmul.f32 %v76, 0.0625
    %v78 = vsub.f32 %v67, %v77
    %v79 = vsub.f32 %v69, %v77
    %v80 = vand.u32 2147483647, %v78
    %v81 = vand.u32 2147483647, %v79
    %v82 = vadd.f32 %v80, %v81
    %v83 = vrot.slane %v82, 4
    %v84 = vadd.f32 %v82, %v83
    %v85 = vrot.slane %v84, 2
    %v86 = vadd.f32 %v84, %v85
    %v87 = vrot.slane %v86, 1
    %v88 = vadd.f32 %v86, %v87
    %v89 = vrcp.pop %v76
    %v90 = vmul.f32 %v88, %v89
    %s91 = smul.u32 0, 128
    %v92 = vlaneseq
    %v93 = vand.u32 %v92, 127
    %v94 = vstv %s91
    %v95 = vadd.s32 %v94, %v93
    %vm96 = vcmp.lt.s32.totalorder %v95, 128
    %v97 = vsel %vm96, %v90, 0.0
    %vm98 = vcmask 1040384
    %v99 = vsel %vm98, %v97, 0.0
    %100 = vadd.xlane.f32.xlu0 %v99
    %v101 = vpop.xlane.xlu0 %100
    %v102 = vrot.slane %v101, 4
    %v103 = vadd.f32 %v101, %v102
    %v104 = vrot.slane %v103, 2
    %v105 = vadd.f32 %v103, %v104
    %v106 = vrot.slane %v105, 1
    %v107 = vadd.f32 %v105, %v106
    %s108 = vtos %v107
    %v109 = vstv %s108
    %110 = vst [vmem:[#allocation2] sm:$0x1] %v109
    // Predicated region
    $region6: #{tpu_custom_call.1} parent=1 // pred_check
      _
    $region7: #{tpu_custom_call.1} parent=1 // pred_check_branch
      %112 = sbr.rel (0) target = $region9
    $region8: #{tpu_custom_call.1} parent=1 // pred_region
      %s114 = ssub.s32 16, 16
      %115 = vsyncadd [#allocation3], %s114
      %s117 = sshll.u32 [#allocation2], 4
      %s118 = int_to_ptr.vmem [resolvable:$true] %s117
      %120 = dma.vmem_to_hbm [thread:$0]  %s118, 16, %s1, [#allocation3]
    $region9: #{tpu_custom_call.1} parent=1 // pred_fallthru
      _
    // Predicated region
    $region10: #{tpu_custom_call.1} parent=1 // pred_check
      _
    $region11: #{tpu_custom_call.1} parent=1 // pred_check_branch
      %122 = sbr.rel (0) target = $region13
    $region12: #{tpu_custom_call.1} parent=1 // pred_region
      %123 = dma.done [#allocation3], 16
    $region13: #{tpu_custom_call.1} parent=1 // pred_fallthru
      _
    %124 = vsyncpa [#allocation3], 1

</llo_original>
